<compile_context>
chip_gen: v5e
topology: v5e:2x2
jax: 0.10.0
libtpu: 0.0.40
codegen_flags: <defaults>
</compile_context>

<pallas_src>
import functools

import jax
import jax.numpy as jnp
from jax.experimental import pallas as pl
from jax.experimental.pallas import tpu as pltpu


def _layernorm_kernel(x_ref, gamma_ref, beta_ref, o_ref, *, eps, feat):
    # x_ref: (TN, K)   gamma_ref / beta_ref: (1, K)   with K = C*H*W
    inv_n = 1.0 / feat
    inv_nm1 = 1.0 / max(feat - 1, 1)   # torch.std default: unbiased (M - 1)

    # Pass 1: mean, accumulated in f32. Re-load x per pass so no block-sized
    # f32 copy has to stay live across passes (matters for bf16 inputs).
    x = x_ref[...].astype(jnp.float32)
    mean = jnp.sum(x, axis=1, keepdims=True) * inv_n            # (TN, 1)

    # Pass 2: centered sum of squares -> unbiased variance (two-pass avoids
    # the cancellation problems of the single-pass sum(x^2) formulation).
    d = x_ref[...].astype(jnp.float32) - mean
    var = jnp.sum(d * d, axis=1, keepdims=True) * inv_nm1       # (TN, 1)
    std = jnp.sqrt(var)

    # Divide only the tiny (TN, 1) stats vector; the block-wide pass below is
    # multiply/add only.
    inv = pl.reciprocal(std + eps, approx=False)

    # Pass 3: normalize + per-channel affine (gamma/beta pre-expanded over H*W).
    x = x_ref[...].astype(jnp.float32)
    o_ref[...] = ((x - mean) * inv * gamma_ref[...] + beta_ref[...]).astype(o_ref.dtype)


def _device_params():
    """(generation, physical VMEM bytes, # TensorCores) with safe fallbacks."""
    kind = ""
    try:
        kind = jax.devices()[0].device_kind.lower()
    except Exception:
        pass
    if "v7" in kind or "tpu7" in kind:
        return "v7x", 64 << 20, 2
    if "v6" in kind:
        return "v6e", 128 << 20, 1
    if "v5 lite" in kind or "v5lite" in kind or "v5e" in kind:
        return "v5e", 128 << 20, 1
    # Unknown generation: assume the smallest physical VMEM / single core.
    return "unknown", 64 << 20, 1


def layer_norm(x, gamma, beta, *, eps=1e-5):
    """x: [N, C, H, W] (NCHW). gamma, beta: [C]. Returns [N, C, H, W]."""
    N, C, H, W = x.shape
    K = C * H * W
    x2 = x.reshape(N, K)
    in_item = x2.dtype.itemsize
    out_item = x2.dtype.itemsize

    # Per-channel affine expanded once to the flattened feature axis (HBM->VMEM
    # once; constant index_map keeps the slabs resident).
    g2 = jnp.broadcast_to(gamma.astype(jnp.float32)[:, None], (C, H * W)).reshape(1, K)
    b2 = jnp.broadcast_to(beta.astype(jnp.float32)[:, None], (C, H * W)).reshape(1, K)

    gen, phys_vmem, num_cores = _device_params()

    # Generation-aware scoped-VMEM budget and input-block target.
    if gen == "v7x":
        vmem_limit = 48 << 20       # 64 MiB physical -> leave headroom
        target_in_block = 6 << 20
    elif gen == "v6e":
        vmem_limit = 96 << 20       # 128 MiB physical: amortize per-step overhead
        target_in_block = 12 << 20
    elif gen == "v5e":
        vmem_limit = 64 << 20       # ~0.82 TB/s HBM: ~4 MiB blocks already hide overhead
        target_in_block = 4 << 20
    else:
        vmem_limit = 40 << 20
        target_in_block = 4 << 20
    usable = vmem_limit - (4 << 20)  # headroom for Mosaic internal scratch

    # Per-block footprint for tn rows:
    #   2x input buffers + 2x output buffers (double-buffered pipeline)
    #   + resident gamma/beta + f32 upcast scratch headroom for sub-f32 inputs.
    per_row = K * (2 * in_item + 2 * out_item + (4 if in_item < 4 else 0))
    fixed = 2 * K * 4
    tn_vmem = max(1, (usable - fixed) // per_row)
    tn_tgt = max(1, target_in_block // max(1, K * in_item))
    tn = min(tn_vmem, tn_tgt, N)

    # dtype-native sublane multiple: f32 -> 8, bf16 -> 16, int8/fp8 -> 32,
    # so multi-block loads/stores stay fully unmasked.
    sublane = {4: 8, 2: 16, 1: 32}.get(in_item, 8)
    if tn < N:
        tn = max(min(sublane, N), (tn // sublane) * sublane)

    # Keep the grid at >= 2 * num_tensorcores steps (megacore sharding on v7x,
    # DMA/compute overlap everywhere) whenever N is large enough to do so with
    # sublane-aligned blocks; tiny batches simply run a single step.
    min_steps = max(2, 2 * num_cores)
    if N >= min_steps * sublane:
        cap = max(sublane, ((N // min_steps) // sublane) * sublane)
        tn = min(tn, cap)
    tn = max(1, min(tn, N))
    grid = (pl.cdiv(N, tn),)

    # If even one sublane-high block overflows the default budget (huge K),
    # raise the scoped limit toward physical VMEM so compilation still succeeds.
    # TODO(synk): for K so large that a single block cannot fit, split the
    # feature axis into an 'arbitrary' grid dim with scratch sum/sumsq
    # accumulators instead of just raising the limit.
    need = per_row * tn + fixed + (4 << 20)
    if need > vmem_limit:
        vmem_limit = min(need, phys_vmem - (8 << 20))

    # Advisory cost for XLA's scheduler: this kernel is memory-bound.
    cost = pl.CostEstimate(
        flops=7 * N * K,
        transcendentals=0,
        bytes_accessed=N * K * (in_item + out_item) + 2 * K * 4,
    )

    out = pl.pallas_call(
        functools.partial(_layernorm_kernel, eps=eps, feat=K),
        out_shape=jax.ShapeDtypeStruct((N, K), x.dtype),
        grid_spec=pltpu.PrefetchScalarGridSpec(
            num_scalar_prefetch=0,
            grid=grid,
            in_specs=[
                pl.BlockSpec((tn, K), lambda i: (i, 0)),
                pl.BlockSpec((1, K), lambda i: (0, 0)),   # resident gamma
                pl.BlockSpec((1, K), lambda i: (0, 0)),   # resident beta
            ],
            out_specs=pl.BlockSpec((tn, K), lambda i: (i, 0)),
        ),
        compiler_params=pltpu.CompilerParams(
            dimension_semantics=("parallel",),
            vmem_limit_bytes=int(vmem_limit),
        ),
        cost_estimate=cost,
    )(x2, g2, b2)

    return out.reshape(N, C, H, W)


if __name__ == "__main__":
    key = jax.random.PRNGKey(0)
    kx, kg = jax.random.split(key)

    N, C, H, W = 2, 4, 16, 16
    x = jax.random.normal(kx, (N, C, H, W), dtype=jnp.float32)

    # nn.Parameter init of the module: gamma ~ U[0,1) of shape (C,), beta zeros.
    gamma = jax.random.uniform(kg, (C,), dtype=jnp.float32)
    beta = jnp.zeros((C,), dtype=jnp.float32)

    y = layer_norm(x, gamma, beta, eps=1e-5)
    jax.block_until_ready(y)

    # Pure-JAX reference matching the PyTorch module: per-sample mean over all
    # features, unbiased std (M - 1), divide by (std + eps), per-channel affine.
    xr = x.reshape(N, -1)
    mean = xr.mean(axis=1).reshape(N, 1, 1, 1)
    std = jnp.sqrt(
        ((xr - xr.mean(axis=1, keepdims=True)) ** 2).sum(axis=1) / (xr.shape[1] - 1)
    ).reshape(N, 1, 1, 1)
    ref = (x - mean) / (std + 1e-5)
    ref = ref * gamma.reshape(1, C, 1, 1) + beta.reshape(1, C, 1, 1)
    assert jnp.allclose(y, ref, atol=1e-5, rtol=1e-4), float(jnp.max(jnp.abs(y - ref)))

    print("KERNEL_OK")
</pallas_src>

<mosaic_0001>
module attributes {stable_mosaic.version = 11 : i64} {
  func.func @_layernorm_kernel(%arg0: i32, %arg1: memref<2x1024xf32, #tpu.memory_space<vmem>>, %arg2: memref<1x1024xf32, #tpu.memory_space<vmem>>, %arg3: memref<1x1024xf32, #tpu.memory_space<vmem>>, %arg4: memref<2x1024xf32, #tpu.memory_space<vmem>>) attributes {dimension_semantics = [#tpu.dimension_semantics<parallel>], iteration_bounds = array<i64: 1>, scalar_prefetch = 0 : i64, scratch_operands = 0 : i64, tpu.core_type = #tpu.core_type<tc>, window_params = [{transform_indices = @transform_0, window_bounds = array<i64: 2, 1024>}, {pipeline_mode = #tpu.pipeline_mode<synchronous>, transform_indices = @transform_1, window_bounds = array<i64: 1, 1024>}, {pipeline_mode = #tpu.pipeline_mode<synchronous>, transform_indices = @transform_2, window_bounds = array<i64: 1, 1024>}, {transform_indices = @transform_3, window_bounds = array<i64: 2, 1024>}]} {
    %c0 = arith.constant 0 : index
    %c0_0 = arith.constant 0 : index
    %0 = vector.load %arg1[%c0, %c0_0] : memref<2x1024xf32, #tpu.memory_space<vmem>>, vector<2x1024xf32>
    %cst = arith.constant dense<0.000000e+00> : vector<2xf32>
    %1 = vector.multi_reduction <add>, %0, %cst [1] : vector<2x1024xf32> to vector<2xf32>
    %2 = vector.shape_cast %1 : vector<2xf32> to vector<2x1xf32>
    %cst_1 = arith.constant 9.765625E-4 : f32
    %3 = vector.broadcast %cst_1 : f32 to vector<2x1xf32>
    %4 = arith.mulf %2, %3 : vector<2x1xf32>
    %c0_2 = arith.constant 0 : index
    %c0_3 = arith.constant 0 : index
    %5 = vector.load %arg1[%c0_2, %c0_3] : memref<2x1024xf32, #tpu.memory_space<vmem>>, vector<2x1024xf32>
    %6 = vector.broadcast %4 : vector<2x1xf32> to vector<2x1024xf32>
    %7 = arith.subf %5, %6 : vector<2x1024xf32>
    %8 = arith.mulf %7, %7 : vector<2x1024xf32>
    %cst_4 = arith.constant dense<0.000000e+00> : vector<2xf32>
    %9 = vector.multi_reduction <add>, %8, %cst_4 [1] : vector<2x1024xf32> to vector<2xf32>
    %10 = vector.shape_cast %9 : vector<2xf32> to vector<2x1xf32>
    %cst_5 = arith.constant 9.77517105E-4 : f32
    %11 = vector.broadcast %cst_5 : f32 to vector<2x1xf32>
    %12 = arith.mulf %10, %11 : vector<2x1xf32>
    %13 = math.sqrt %12 : vector<2x1xf32>
    %cst_6 = arith.constant 9.99999974E-6 : f32
    %14 = vector.broadcast %cst_6 : f32 to vector<2x1xf32>
    %15 = arith.addf %13, %14 : vector<2x1xf32>
    %16 = tpu.reciprocal %15 : vector<2x1xf32> -> vector<2x1xf32>
    %c0_7 = arith.constant 0 : index
    %c0_8 = arith.constant 0 : index
    %17 = vector.load %arg1[%c0_7, %c0_8] : memref<2x1024xf32, #tpu.memory_space<vmem>>, vector<2x1024xf32>
    %18 = vector.broadcast %4 : vector<2x1xf32> to vector<2x1024xf32>
    %19 = arith.subf %17, %18 : vector<2x1024xf32>
    %20 = vector.broadcast %16 : vector<2x1xf32> to vector<2x1024xf32>
    %21 = arith.mulf %19, %20 : vector<2x1024xf32>
    %c0_9 = arith.constant 0 : index
    %c0_10 = arith.constant 0 : index
    %22 = vector.load %arg2[%c0_9, %c0_10] : memref<1x1024xf32, #tpu.memory_space<vmem>>, vector<1x1024xf32>
    %23 = vector.broadcast %22 : vector<1x1024xf32> to vector<2x1024xf32>
    %24 = arith.mulf %21, %23 : vector<2x1024xf32>
    %c0_11 = arith.constant 0 : index
    %c0_12 = arith.constant 0 : index
    %25 = vector.load %arg3[%c0_11, %c0_12] : memref<1x1024xf32, #tpu.memory_space<vmem>>, vector<1x1024xf32>
    %26 = vector.broadcast %25 : vector<1x1024xf32> to vector<2x1024xf32>
    %27 = arith.addf %24, %26 : vector<2x1024xf32>
    %c0_13 = arith.constant 0 : index
    %c0_14 = arith.constant 0 : index
    %28 = vector.load %arg4[%c0_13, %c0_14] : memref<2x1024xf32, #tpu.memory_space<vmem>>, vector<2x1024xf32>
    tpu.vector_store %arg4[%c0_13, %c0_14], %27 {strides = array<i32>} : memref<2x1024xf32, #tpu.memory_space<vmem>>, vector<2x1024xf32>,
    return
  }
  func.func @transform_0(%arg0: i32) -> (i32, i32) {
    %c0_i32 = arith.constant 0 : i32
    %c0_i32_0 = arith.constant 0 : i32
    return %arg0, %c0_i32 : i32, i32
  }
  func.func @transform_1(%arg0: i32) -> (i32, i32) {
    %c0_i32 = arith.constant 0 : i32
    %c0_i32_0 = arith.constant 0 : i32
    %c0_i32_1 = arith.constant 0 : i32
    return %c0_i32, %c0_i32_0 : i32, i32
  }
  func.func @transform_2(%arg0: i32) -> (i32, i32) {
    %c0_i32 = arith.constant 0 : i32
    %c0_i32_0 = arith.constant 0 : i32
    %c0_i32_1 = arith.constant 0 : i32
    return %c0_i32, %c0_i32_0 : i32, i32
  }
  func.func @transform_3(%arg0: i32) -> (i32, i32) {
    %c0_i32 = arith.constant 0 : i32
    %c0_i32_0 = arith.constant 0 : i32
    return %arg0, %c0_i32 : i32, i32
  }
}

</mosaic_0001>

<llo_original>
// kernel: tpu_custom_call.1
$region0: #{tpu_custom_call.1}
  #allocation0 [shape = 'u32[]', space=smem, size = 0x4, offset = 0x4, fixed_abs, tag = 'smem constant byte address 0x4 - core index']
  #allocation1 [shape = 'u32[72,128]{1,0:T(1,128)}', space=vmem, size = 0x9000, scoped, tag = 'internal scratch']
  %s0 = inlined_call_operand.hbm [shape: f32[2,1024], index: 0, kind: input, shape index: {}]
  %s1 = inlined_call_operand.hbm [shape: f32[1,1024], index: 1, kind: input, shape index: {}]
  %s2 = inlined_call_operand.hbm [shape: f32[1,1024], index: 2, kind: input, shape index: {}]
  %s3 = inlined_call_operand.hbm [shape: f32[2,1024], index: 3, kind: output, shape index: {}]
  %s4 = sld [smem:[#allocation0]]
  $region34: #{tpu_custom_call.1} parent=0
    _
  %s6 = ssub.s32 1, %s4
  %s7 = scalar_select 0, %s6, %s4
  $region1: #{tpu_custom_call.1} parent=0
    #allocation2 [shape = 'u8[8192]{0}', space=vmem, size = 0x2000, scoped, tag = 'input window, operand 0, single buffered']
    #allocation3 [shape = 's32[1]{0}', space=sflag, size = 0x4, scoped, tag = 'scoped memory for tpu_custom_call.1']
    #allocation4 [shape = 's32[1]{0}', space=sflag, size = 0x4, scoped, tag = 'scoped memory for tpu_custom_call.1']
    #allocation5 [shape = 'u8[4096]{0}', space=vmem, size = 0x1000, scoped, tag = 'input window, operand 1, single buffered']
    #allocation6 [shape = 's32[1]{0}', space=sflag, size = 0x4, scoped, tag = 'scoped memory for tpu_custom_call.1']
    #allocation7 [shape = 'u8[4096]{0}', space=vmem, size = 0x1000, scoped, tag = 'input window, operand 2, single buffered']
    #allocation8 [shape = 'u8[8192]{0}', space=vmem, size = 0x2000, scoped, tag = 'output window, operand 0, single buffered']
    %8 = vsyncpa [#allocation3], 0
    %9 = vsyncpa [#allocation6], 0
    %10 = vsyncpa [#allocation4], 0
    // Predicated region
    $region2: #{tpu_custom_call.1} parent=1 // pred_check
      _
    $region3: #{tpu_custom_call.1} parent=1 // pred_check_branch
      %12 = sbr.rel (0) target = $region5
    $region4: #{tpu_custom_call.1} parent=1 // pred_region
      %14 = vsyncadd [#allocation3], 0
      %s16 = sshll.u32 %s0, 4
      %s17 = int_to_ptr.hbm [resolvable:$true] %s16
      %s18 = sshll.u32 [#allocation2], 4
      %s19 = int_to_ptr.vmem [resolvable:$true] %s18
      %21 = dma.hbm_to_vmem [thread:$0]  %s17, 256, %s19, [#allocation3]
    $region5: #{tpu_custom_call.1} parent=1 // pred_fallthru
      _
    // Predicated region
    $region6: #{tpu_custom_call.1} parent=1 // pred_check
      _
    $region7: #{tpu_custom_call.1} parent=1 // pred_check_branch
      %23 = sbr.rel (0) target = $region9
    $region8: #{tpu_custom_call.1} parent=1 // pred_region
      %25 = vsyncadd [#allocation6], 0
      %s27 = sshll.u32 %s1, 4
      %s28 = int_to_ptr.hbm [resolvable:$true] %s27
      %s29 = sshll.u32 [#allocation5], 4
      %s30 = int_to_ptr.vmem [resolvable:$true] %s29
      %32 = dma.hbm_to_vmem [thread:$0]  %s28, 128, %s30, [#allocation6]
    $region9: #{tpu_custom_call.1} parent=1 // pred_fallthru
      _
    // Predicated region
    $region10: #{tpu_custom_call.1} parent=1 // pred_check
      _
    $region11: #{tpu_custom_call.1} parent=1 // pred_check_branch
      %34 = sbr.rel (0) target = $region13
    $region12: #{tpu_custom_call.1} parent=1 // pred_region
      %36 = vsyncadd [#allocation6], 0
      %s38 = sshll.u32 %s2, 4
      %s39 = int_to_ptr.hbm [resolvable:$true] %s38
      %s40 = sshll.u32 [#allocation7], 4
      %s41 = int_to_ptr.vmem [resolvable:$true] %s40
      %43 = dma.hbm_to_vmem [thread:$0]  %s39, 128, %s41, [#allocation6]
    $region13: #{tpu_custom_call.1} parent=1 // pred_fallthru
      _
    // Predicated region
    $region14: #{tpu_custom_call.1} parent=1 // pred_check
      _
    $region15: #{tpu_custom_call.1} parent=1 // pred_check_branch
      %45 = sbr.rel (0) target = $region17
    $region16: #{tpu_custom_call.1} parent=1 // pred_region
      %47 = dma.done [#allocation3], 256
    $region17: #{tpu_custom_call.1} parent=1 // pred_fallthru
      _
    // Predicated region
    $region18: #{tpu_custom_call.1} parent=1 // pred_check
      _
    $region19: #{tpu_custom_call.1} parent=1 // pred_check_branch
      %49 = sbr.rel (0) target = $region21
    $region20: #{tpu_custom_call.1} parent=1 // pred_region
      %51 = dma.done [#allocation6], 128
    $region21: #{tpu_custom_call.1} parent=1 // pred_fallthru
      _
    // Predicated region
    $region22: #{tpu_custom_call.1} parent=1 // pred_check
      _
    $region23: #{tpu_custom_call.1} parent=1 // pred_check_branch
      %53 = sbr.rel (0) target = $region25
    $region24: #{tpu_custom_call.1} parent=1 // pred_region
      %55 = dma.done [#allocation6], 128
    $region25: #{tpu_custom_call.1} parent=1 // pred_fallthru
      _
    %v56 = vld [vmem:[#allocation2] sm:$0xff]
    %v57 = vld [vmem:[#allocation2 + $0x8] sm:$0xff]
    %60 = vst [vmem:[#allocation1] ss:$4 sm:$0xff] %v56
    %s61 = scalar_lea.vmem [#allocation1], 32
    %62 = vst [vmem:[%s61] ss:$4 sm:$0xff] %v57
    %v63 = vld.sshfl [vmem:[#allocation1] sm:$0xff pattern:$0x73625140]
    %v64 = vld.sshfl [vmem:[#allocation1 + $0x8] sm:$0xff pattern:$0x73625140]
    %v65 = vld.sshfl [vmem:[#allocation1 + $0x10] sm:$0xff pattern:$0x73625140]
    %v66 = vld.sshfl [vmem:[#allocation1 + $0x18] sm:$0xff pattern:$0x73625140]
    %v67 = vld.sshfl [vmem:[#allocation1 + $0x20] sm:$0xff pattern:$0x73625140]
    %v68 = vld.sshfl [vmem:[#allocation1 + $0x28] sm:$0xff pattern:$0x73625140]
    %v69 = vld.sshfl [vmem:[#allocation1 + $0x30] sm:$0xff pattern:$0x73625140]
    %v70 = vld.sshfl [vmem:[#allocation1 + $0x38] sm:$0xff pattern:$0x73625140]
    %vm79 = vcmask 1041408
    %v80 = vsel %vm79, %v63, 0.0
    %v81 = vsel %vm79, %v64, 0.0
    %v82 = vadd.f32 %v80, %v81
    %v83 = vsel %vm79, %v65, 0.0
    %v84 = vadd.f32 %v82, %v83
    %v85 = vsel %vm79, %v66, 0.0
    %v86 = vadd.f32 %v84, %v85
    %v87 = vsel %vm79, %v67, 0.0
    %v88 = vadd.f32 %v86, %v87
    %v89 = vsel %vm79, %v68, 0.0
    %v90 = vadd.f32 %v88, %v89
    %v91 = vsel %vm79, %v69, 0.0
    %v92 = vadd.f32 %v90, %v91
    %v93 = vsel %vm79, %v70, 0.0
    %v94 = vadd.f32 %v92, %v93
    %95 = vadd.xlane.f32.xlu0 %v94
    %v96 = vpop.xlane.xlu0 %95
    %v97 = vmul.f32 %v96, 0.0009765625
    %v100 = vunpack.c.l.s4 269488144
    %v101 = vunpack.c.0.s8 %v100
    %v102 = vperm.slane %v97, %v101
    %v104 = vsub.f32 %v56, %v102
    %v105 = vsub.f32 %v57, %v102
    %v106 = vmul.f32 %v104, %v104
    %v107 = vmul.f32 %v105, %v105
    %110 = vst [vmem:[#allocation1] ss:$4 sm:$0xff] %v106
    %s111 = scalar_lea.vmem [#allocation1], 32
    %112 = vst [vmem:[%s111] ss:$4 sm:$0xff] %v107
    %v113 = vld.sshfl [vmem:[#allocation1] sm:$0xff pattern:$0x73625140]
    %v114 = vld.sshfl [vmem:[#allocation1 + $0x8] sm:$0xff pattern:$0x73625140]
    %v115 = vld.sshfl [vmem:[#allocation1 + $0x10] sm:$0xff pattern:$0x73625140]
    %v116 = vld.sshfl [vmem:[#allocation1 + $0x18] sm:$0xff pattern:$0x73625140]
    %v117 = vld.sshfl [vmem:[#allocation1 + $0x20] sm:$0xff pattern:$0x73625140]
    %v118 = vld.sshfl [vmem:[#allocation1 + $0x28] sm:$0xff pattern:$0x73625140]
    %v119 = vld.sshfl [vmem:[#allocation1 + $0x30] sm:$0xff pattern:$0x73625140]
    %v120 = vld.sshfl [vmem:[#allocation1 + $0x38] sm:$0xff pattern:$0x73625140]
    %v129 = vsel %vm79, %v113, 0.0
    %v130 = vsel %vm79, %v114, 0.0
    %v131 = vadd.f32 %v129, %v130
    %v132 = vsel %vm79, %v115, 0.0
    %v133 = vadd.f32 %v131, %v132
    %v134 = vsel %vm79, %v116, 0.0
    %v135 = vadd.f32 %v133, %v134
    %v136 = vsel %vm79, %v117, 0.0
    %v137 = vadd.f32 %v135, %v136
    %v138 = vsel %vm79, %v118, 0.0
    %v139 = vadd.f32 %v137, %v138
    %v140 = vsel %vm79, %v119, 0.0
    %v141 = vadd.f32 %v139, %v140
    %v142 = vsel %vm79, %v120, 0.0
    %v143 = vadd.f32 %v141, %v142
    %144 = vadd.xlane.f32.xlu0 %v143
    %v145 = vpop.xlane.xlu0 %144
    %v146 = vmul.f32 %v145, 0.0009775171
    %v147 = vrsqrt.pop %v146
    %v148 = vmul.f32 %v147, %v146
    %v149 = vmul.f32 %v148, %v147
    %v150 = vmul.f32 0.5, %v149
    %v151 = vsub.f32 1.5, %v150
    %v152 = vmul.f32 %v147, %v151
    %v153 = vmul.f32 %v146, %v152
    %vm154 = vcmp.eq.f32.partialorder %v146, inf
    %v155 = vsel %vm154, %v146, %v153
    %vm156 = vcmp.eq.f32.partialorder %v146, 0.0
    %v157 = vand.u32 %v146, 2147483648
    %v158 = vsel %vm156, %v157, %v155
    %v159 = vadd.f32 %v158, 1e-05
    %v160 = vrcp.pop %v159
    %v161 = vmul.f32 %v159, %v160
    %v162 = vsub.f32 1.0, %v161
    %v163 = vmul.f32 %v160, %v162
    %v164 = vadd.f32 %v160, %v163
    %vm165 = vweird.f32 %v159
    %vm166 = vweird.f32 %v160
    %vm167 = vmor %vm165, %vm166
    %v168 = vsel %vm167, %v160, %v164
    %v169 = vand.u32 2147483647, %v159
    %vm170 = vcmp.eq.f32.partialorder %v169, 8.507059e+37
    %v171 = vand.u32 %v159, 2147483648
    %v172 = vor.u32 1.1754944e-38, %v171
    %v173 = vsel %vm170, %v172, %v168
    %v176 = vunpack.c.l.s4 269488144
    %v177 = vunpack.c.0.s8 %v176
    %v178 = vperm.slane %v173, %v177
    %v180 = vmul.f32 %v104, %v178
    %v181 = vmul.f32 %v105, %v178
    %v182 = vld [vmem:[#allocation5] sm:$0xff]
    %v184 = vperm.slane %v182, 0
    %v185 = vperm.slane %v182, 1
    %v186 = vperm.slane %v182, 2
    %v187 = vperm.slane %v182, 3
    %v188 = vperm.slane %v182, 4
    %v189 = vperm.slane %v182, 5
    %v190 = vperm.slane %v182, 6
    %v191 = vperm.slane %v182, 7
    %v192 = vrot.slane %v185, 6
    %v193 = vrot.slane %v186, 4
    %v194 = vrot.slane %v187, 2
    %v195 = vrot.slane %v189, 6
    %v196 = vrot.slane %v190, 4
    %v197 = vrot.slane %v191, 2
    %v198 = vsel %vm79, %v184, %v192
    %vm199 = vcmask 1045508
    %v200 = vsel %vm199, %v193, %v194
    %vm201 = vcmask 1043456
    %v202 = vsel %vm201, %v198, %v200
    %v203 = vsel %vm79, %v188, %v195
    %v204 = vsel %vm199, %v196, %v197
    %v205 = vsel %vm201, %v203, %v204
    %v208 = vmul.f32 %v180, %v202
    %v209 = vmul.f32 %v181, %v205
    %v210 = vld [vmem:[#allocation7] sm:$0xff]
    %v212 = vperm.slane %v210, 0
    %v213 = vperm.slane %v210, 1
    %v214 = vperm.slane %v210, 2
    %v215 = vperm.slane %v210, 3
    %v216 = vperm.slane %v210, 4
    %v217 = vperm.slane %v210, 5
    %v218 = vperm.slane %v210, 6
    %v219 = vperm.slane %v210, 7
    %v220 = vrot.slane %v213, 6
    %v221 = vrot.slane %v214, 4
    %v222 = vrot.slane %v215, 2
    %v223 = vrot.slane %v217, 6
    %v224 = vrot.slane %v218, 4
    %v225 = vrot.slane %v219, 2
    %v226 = vsel %vm79, %v212, %v220
    %v227 = vsel %vm199, %v221, %v222
    %v228 = vsel %vm201, %v226, %v227
    %v229 = vsel %vm79, %v216, %v223
    %v230 = vsel %vm199, %v224, %v225
    %v231 = vsel %vm201, %v229, %v230
    %v234 = vadd.f32 %v208, %v228
    %v235 = vadd.f32 %v209, %v231
    %236 = vst [vmem:[#allocation8] sm:$0xff] %v234
    %237 = vst [vmem:[#allocation8 + $0x8] sm:$0xff] %v235
    // Predicated region
    $region26: #{tpu_custom_call.1} parent=1 // pred_check
      _
    $region27: #{tpu_custom_call.1} parent=1 // pred_check_branch
      %239 = sbr.rel (0) target = $region29
    $region28: #{tpu_custom_call.1} parent=1 // pred_region
      %241 = vsyncadd [#allocation4], 0
      %s243 = sshll.u32 [#allocation8], 4
      %s244 = int_to_ptr.vmem [resolvable:$true] %s243
      %s245 = sshll.u32 %s3, 4
      %s246 = int_to_ptr.hbm [resolvable:$true] %s245
      %248 = dma.vmem_to_hbm [thread:$0]  %s244, 256, %s246, [#allocation4]
    $region29: #{tpu_custom_call.1} parent=1 // pred_fallthru
      _
    // Predicated region
    $region30: #{tpu_custom_call.1} parent=1 // pred_check
      _
    $region31: #{tpu_custom_call.1} parent=1 // pred_check_branch
      %250 = sbr.rel (0) target = $region33
    $region32: #{tpu_custom_call.1} parent=1 // pred_region
      %252 = dma.done [#allocation4], 256
    $region33: #{tpu_custom_call.1} parent=1 // pred_fallthru
      _
    %253 = vsyncpa [#allocation3], 1
    %254 = vsyncpa [#allocation6], 1
    %255 = vsyncpa [#allocation4], 1

</llo_original>
